<compile_context>
chip_gen: v5e
topology: v5e:2x2
jax: 0.10.0
libtpu: 0.0.40
codegen_flags: <defaults>
</compile_context>

<pallas_src>
import jax
import jax.numpy as jnp
from jax import lax
from jax.experimental import pallas as pl
from jax.experimental.pallas import tpu as pltpu
import numpy as np

H_IN, W_IN = 49, 89        # input spatial size
H_MID, W_MID = 51, 91      # after conv1 (1x1, pad 1) and conv2 (3x3, pad 1)
H_OUT, W_OUT = 53, 93      # after conv3 (1x1, pad 1)
HC, WC = 56, 128           # TPU-friendly compute canvas (multiple of (8, 128))

# Packed-parameter layout (single f32[16] SMEM input):
#   [0]=w1, [1]=b1, [2..10]=w2 row-major, [11]=b2, [12]=w3, [13]=b3, [14:16]=pad
P_W1, P_B1, P_W2, P_B2, P_W3, P_B3 = 0, 1, 2, 11, 12, 13


def model_tanh_kernel(p_ref, x_ref, o_ref, canvas_ref):
    """p_ref      : SMEM f32[16]    packed parameters (see layout above).
    x_ref      : VMEM f32[49, 89]   natural input, embedded in-kernel.
    o_ref      : VMEM f32[53, 93]   final output, written directly.
    canvas_ref : VMEM f32[56, 128]  scratch used to zero-pad / embed x.
    """
    w1 = p_ref[P_W1]
    b1 = p_ref[P_B1]
    b2 = p_ref[P_B2]
    w3 = p_ref[P_W3]
    b3 = p_ref[P_B3]

    # ---- embed x into a zero-padded (HC, WC) canvas at offset (2, 2) --------
    # Store x at (0, 0) (no relayout), zero only the strips x does not cover
    # (these include the wrap-source rows 54-55 / lanes 126-127 that the
    # (+2, +2) rolls pull into the padding ring), then shift by (+2, +2).
    canvas_ref[H_IN:HC, :] = jnp.zeros((HC - H_IN, WC), jnp.float32)
    canvas_ref[0:H_IN, W_IN:WC] = jnp.zeros((H_IN, WC - W_IN), jnp.float32)
    canvas_ref[0:H_IN, 0:W_IN] = x_ref[...]
    xc = pltpu.roll(pltpu.roll(canvas_ref[...], 2, axis=0), 2, axis=1)

    # Canvas frame == conv3-output frame: conv1/conv2 outputs (51 x 91) live at
    # canvas offset (1, 1); the zero ring around them IS the zero padding the
    # next conv needs.
    ii = lax.broadcasted_iota(jnp.int32, (HC, WC), 0)
    jj = lax.broadcasted_iota(jnp.int32, (HC, WC), 1)
    mask_mid = (ii >= 1) & (ii <= H_MID) & (jj >= 1) & (jj <= W_MID)

    # conv1: 1x1 conv with padding=1, then tanh; zero outside the 51x91 window.
    y2p = jnp.where(mask_mid, jnp.tanh(w1 * xc + b1), 0.0)

    # conv2: 3x3 conv with padding=1, then tanh.
    # Horizontal-then-vertical accumulation: shl/shr computed once and reused
    # by all three row taps; only the top/bottom horizontal sums need a
    # sublane roll.  4 rolls total (was 8).
    shl = pltpu.roll(y2p, 1, axis=1)        # shl[i, j] = y2p[i, j-1]
    shr = pltpu.roll(y2p, WC - 1, axis=1)   # shr[i, j] = y2p[i, j+1]

    h_top = p_ref[P_W2 + 0] * shl + p_ref[P_W2 + 1] * y2p + p_ref[P_W2 + 2] * shr
    acc = pltpu.roll(h_top, 1, axis=0)                       # row i-1 taps
    acc = acc + (p_ref[P_W2 + 3] * shl + p_ref[P_W2 + 4] * y2p
                 + p_ref[P_W2 + 5] * shr + b2)               # row i taps + bias
    h_bot = p_ref[P_W2 + 6] * shl + p_ref[P_W2 + 7] * y2p + p_ref[P_W2 + 8] * shr
    acc = acc + pltpu.roll(h_bot, HC - 1, axis=0)            # row i+1 taps
    y4p = jnp.where(mask_mid, jnp.tanh(acc), 0.0)

    # conv3: 1x1 conv with padding=1, then tanh.  y4p is exactly y4 zero-padded
    # by 1.  Do fma + tanh in the native full-(8,128) layout; mask/slice only
    # at the single store.
    out_full = jnp.tanh(w3 * y4p + b3)
    o_ref[...] = out_full[:H_OUT, :W_OUT]


def pack_params(w1, b1, w2, b2, w3, b3):
    """Build the single f32[16] packed-parameter array (do this ONCE at model
    init, outside the per-call path)."""
    flat = jnp.concatenate([
        w1.reshape(-1).astype(jnp.float32),
        b1.reshape(-1).astype(jnp.float32),
        w2.reshape(-1).astype(jnp.float32),
        b2.reshape(-1).astype(jnp.float32),
        w3.reshape(-1).astype(jnp.float32),
        b3.reshape(-1).astype(jnp.float32),
    ])
    return jnp.pad(flat, (0, 16 - flat.shape[0]))


def model_tanh(x_nchw, packed_params):
    """x_nchw: f32[1, 1, 49, 89].  Returns f32[1, 1, 53, 93]."""
    x2d = x_nchw[0, 0].astype(jnp.float32)                # (49, 89)

    smem = pl.BlockSpec(memory_space=pltpu.MemorySpace.SMEM)
    vmem = pl.BlockSpec(memory_space=pltpu.MemorySpace.VMEM)

    out2d = pl.pallas_call(
        model_tanh_kernel,
        out_shape=jax.ShapeDtypeStruct((H_OUT, W_OUT), jnp.float32),
        in_specs=[smem, vmem],
        out_specs=vmem,
        scratch_shapes=[pltpu.VMEM((HC, WC), jnp.float32)],
    )(packed_params, x2d)

    return out2d.reshape(1, 1, H_OUT, W_OUT)


def model_tanh_reference(x, w1, b1, w2, b2, w3, b3):
    """Pure-JAX reference (NCHW convs), mirrors the PyTorch forward."""
    dn = lax.conv_dimension_numbers(x.shape, w1.shape, ("NCHW", "OIHW", "NCHW"))
    y = lax.conv_general_dilated(x, w1, (1, 1), [(1, 1), (1, 1)],
                                 dimension_numbers=dn) + b1
    y = jnp.tanh(y)
    y = lax.conv_general_dilated(y, w2, (1, 1), [(1, 1), (1, 1)],
                                 dimension_numbers=dn) + b2
    y = jnp.tanh(y)
    y = lax.conv_general_dilated(y, w3, (1, 1), [(1, 1), (1, 1)],
                                 dimension_numbers=dn) + b3
    y = jnp.tanh(y)
    return y


if __name__ == "__main__":
    key = jax.random.PRNGKey(0)
    k1, k2, k3, k4, k5, k6, k7 = jax.random.split(key, 7)

    # Deterministic parameter init, shapes per torch.nn.Conv2d(1, 1, k, padding=1)
    # (uniform in [-1/sqrt(fan_in), 1/sqrt(fan_in)], like PyTorch's default).
    w1 = jax.random.uniform(k1, (1, 1, 1, 1), jnp.float32, -1.0, 1.0)
    b1 = jax.random.uniform(k2, (1,), jnp.float32, -1.0, 1.0)
    w2 = jax.random.uniform(k3, (1, 1, 3, 3), jnp.float32, -1.0 / 3, 1.0 / 3)
    b2 = jax.random.uniform(k4, (1,), jnp.float32, -1.0 / 3, 1.0 / 3)
    w3 = jax.random.uniform(k5, (1, 1, 1, 1), jnp.float32, -1.0, 1.0)
    b3 = jax.random.uniform(k6, (1,), jnp.float32, -1.0, 1.0)

    x = jax.random.uniform(k7, (1, 1, H_IN, W_IN), jnp.float32)

    # Pack parameters once, outside the per-call jitted path.
    params = jax.block_until_ready(pack_params(w1, b1, w2, b2, w3, b3))

    out = jax.jit(model_tanh)(x, params)
    out = jax.block_until_ready(out)

    ref = jax.block_until_ready(model_tanh_reference(x, w1, b1, w2, b2, w3, b3))
    assert out.shape == (1, 1, H_OUT, W_OUT), out.shape
    np.testing.assert_allclose(np.asarray(out), np.asarray(ref),
                               rtol=1e-3, atol=1e-3)

    print("KERNEL_OK")
</pallas_src>

<mosaic_0001>
module attributes {stable_mosaic.version = 11 : i64} {
  func.func @model_tanh_kernel(%arg0: memref<16xf32, #tpu.memory_space<smem>>, %arg1: memref<49x89xf32, #tpu.memory_space<vmem>>, %arg2: memref<53x93xf32, #tpu.memory_space<vmem>>, %arg3: memref<56x128xf32, #tpu.memory_space<vmem>>) attributes {dimension_semantics = [], scalar_prefetch = 0 : i64, scratch_operands = 1 : i64, tpu.core_type = #tpu.core_type<tc>} {
    %c0 = arith.constant 0 : index
    %0 = memref.load %arg0[%c0] : memref<16xf32, #tpu.memory_space<smem>>
    %c1 = arith.constant 1 : index
    %1 = memref.load %arg0[%c1] : memref<16xf32, #tpu.memory_space<smem>>
    %c11 = arith.constant 11 : index
    %2 = memref.load %arg0[%c11] : memref<16xf32, #tpu.memory_space<smem>>
    %c12 = arith.constant 12 : index
    %3 = memref.load %arg0[%c12] : memref<16xf32, #tpu.memory_space<smem>>
    %c13 = arith.constant 13 : index
    %4 = memref.load %arg0[%c13] : memref<16xf32, #tpu.memory_space<smem>>
    %cst = arith.constant 0.000000e+00 : f32
    %5 = vector.broadcast %cst : f32 to vector<7x128xf32>
    %c49 = arith.constant 49 : index
    %c0_0 = arith.constant 0 : index
    %6 = vector.load %arg3[%c49, %c0_0] : memref<56x128xf32, #tpu.memory_space<vmem>>, vector<7x128xf32>
    tpu.vector_store %arg3[%c49, %c0_0], %5 {strides = array<i32>} : memref<56x128xf32, #tpu.memory_space<vmem>>, vector<7x128xf32>,
    %cst_1 = arith.constant 0.000000e+00 : f32
    %7 = vector.broadcast %cst_1 : f32 to vector<49x39xf32>
    %c0_2 = arith.constant 0 : index
    %c89 = arith.constant 89 : index
    %8 = vector.load %arg3[%c0_2, %c89] : memref<56x128xf32, #tpu.memory_space<vmem>>, vector<49x39xf32>
    tpu.vector_store %arg3[%c0_2, %c89], %7 {strides = array<i32>} : memref<56x128xf32, #tpu.memory_space<vmem>>, vector<49x39xf32>,
    %c0_3 = arith.constant 0 : index
    %c0_4 = arith.constant 0 : index
    %9 = vector.load %arg1[%c0_3, %c0_4] : memref<49x89xf32, #tpu.memory_space<vmem>>, vector<49x89xf32>
    %c0_5 = arith.constant 0 : index
    %c0_6 = arith.constant 0 : index
    %10 = vector.load %arg3[%c0_5, %c0_6] : memref<56x128xf32, #tpu.memory_space<vmem>>, vector<49x89xf32>
    tpu.vector_store %arg3[%c0_5, %c0_6], %9 {strides = array<i32>} : memref<56x128xf32, #tpu.memory_space<vmem>>, vector<49x89xf32>,
    %c0_7 = arith.constant 0 : index
    %c0_8 = arith.constant 0 : index
    %11 = vector.load %arg3[%c0_7, %c0_8] : memref<56x128xf32, #tpu.memory_space<vmem>>, vector<56x128xf32>
    %c2_i32 = arith.constant 2 : i32
    %12 = tpu.dynamic_rotate %11 by %c2_i32 dim 0 : vector<56x128xf32>, i32 -> vector<56x128xf32>
    %c2_i32_9 = arith.constant 2 : i32
    %13 = tpu.dynamic_rotate %12 by %c2_i32_9 dim 1 : vector<56x128xf32>, i32 -> vector<56x128xf32>
    %14 = tpu.iota {dimensions = array<i32: 0>} : vector<56x128xi32>
    %15 = tpu.iota {dimensions = array<i32: 1>} : vector<56x128xi32>
    %c1_i32 = arith.constant 1 : i32
    %16 = vector.broadcast %c1_i32 : i32 to vector<56x128xi32>
    %17 = arith.cmpi sge, %14, %16 : vector<56x128xi32>
    %c51_i32 = arith.constant 51 : i32
    %18 = vector.broadcast %c51_i32 : i32 to vector<56x128xi32>
    %19 = arith.cmpi sle, %14, %18 : vector<56x128xi32>
    %20 = arith.andi %17, %19 : vector<56x128xi1>
    %c1_i32_10 = arith.constant 1 : i32
    %21 = vector.broadcast %c1_i32_10 : i32 to vector<56x128xi32>
    %22 = arith.cmpi sge, %15, %21 : vector<56x128xi32>
    %23 = arith.andi %20, %22 : vector<56x128xi1>
    %c91_i32 = arith.constant 91 : i32
    %24 = vector.broadcast %c91_i32 : i32 to vector<56x128xi32>
    %25 = arith.cmpi sle, %15, %24 : vector<56x128xi32>
    %26 = arith.andi %23, %25 : vector<56x128xi1>
    %27 = vector.broadcast %0 : f32 to vector<56x128xf32>
    %28 = arith.mulf %27, %13 : vector<56x128xf32>
    %29 = vector.broadcast %1 : f32 to vector<56x128xf32>
    %30 = arith.addf %28, %29 : vector<56x128xf32>
    %31 = math.tanh %30 : vector<56x128xf32>
    %cst_11 = arith.constant 0.000000e+00 : f32
    %32 = vector.broadcast %cst_11 : f32 to vector<56x128xf32>
    %33 = arith.select %26, %31, %32 : vector<56x128xi1>, vector<56x128xf32>
    %c1_i32_12 = arith.constant 1 : i32
    %34 = tpu.dynamic_rotate %33 by %c1_i32_12 dim 1 : vector<56x128xf32>, i32 -> vector<56x128xf32>
    %c127_i32 = arith.constant 127 : i32
    %35 = tpu.dynamic_rotate %33 by %c127_i32 dim 1 : vector<56x128xf32>, i32 -> vector<56x128xf32>
    %c2 = arith.constant 2 : index
    %36 = memref.load %arg0[%c2] : memref<16xf32, #tpu.memory_space<smem>>
    %37 = vector.broadcast %36 : f32 to vector<56x128xf32>
    %38 = arith.mulf %37, %34 : vector<56x128xf32>
    %c3 = arith.constant 3 : index
    %39 = memref.load %arg0[%c3] : memref<16xf32, #tpu.memory_space<smem>>
    %40 = vector.broadcast %39 : f32 to vector<56x128xf32>
    %41 = arith.mulf %40, %33 : vector<56x128xf32>
    %42 = arith.addf %38, %41 : vector<56x128xf32>
    %c4 = arith.constant 4 : index
    %43 = memref.load %arg0[%c4] : memref<16xf32, #tpu.memory_space<smem>>
    %44 = vector.broadcast %43 : f32 to vector<56x128xf32>
    %45 = arith.mulf %44, %35 : vector<56x128xf32>
    %46 = arith.addf %42, %45 : vector<56x128xf32>
    %c1_i32_13 = arith.constant 1 : i32
    %47 = tpu.dynamic_rotate %46 by %c1_i32_13 dim 0 : vector<56x128xf32>, i32 -> vector<56x128xf32>
    %c5 = arith.constant 5 : index
    %48 = memref.load %arg0[%c5] : memref<16xf32, #tpu.memory_space<smem>>
    %49 = vector.broadcast %48 : f32 to vector<56x128xf32>
    %50 = arith.mulf %49, %34 : vector<56x128xf32>
    %c6 = arith.constant 6 : index
    %51 = memref.load %arg0[%c6] : memref<16xf32, #tpu.memory_space<smem>>
    %52 = vector.broadcast %51 : f32 to vector<56x128xf32>
    %53 = arith.mulf %52, %33 : vector<56x128xf32>
    %54 = arith.addf %50, %53 : vector<56x128xf32>
    %c7 = arith.constant 7 : index
    %55 = memref.load %arg0[%c7] : memref<16xf32, #tpu.memory_space<smem>>
    %56 = vector.broadcast %55 : f32 to vector<56x128xf32>
    %57 = arith.mulf %56, %35 : vector<56x128xf32>
    %58 = arith.addf %54, %57 : vector<56x128xf32>
    %59 = vector.broadcast %2 : f32 to vector<56x128xf32>
    %60 = arith.addf %58, %59 : vector<56x128xf32>
    %61 = arith.addf %47, %60 : vector<56x128xf32>
    %c8 = arith.constant 8 : index
    %62 = memref.load %arg0[%c8] : memref<16xf32, #tpu.memory_space<smem>>
    %63 = vector.broadcast %62 : f32 to vector<56x128xf32>
    %64 = arith.mulf %63, %34 : vector<56x128xf32>
    %c9 = arith.constant 9 : index
    %65 = memref.load %arg0[%c9] : memref<16xf32, #tpu.memory_space<smem>>
    %66 = vector.broadcast %65 : f32 to vector<56x128xf32>
    %67 = arith.mulf %66, %33 : vector<56x128xf32>
    %68 = arith.addf %64, %67 : vector<56x128xf32>
    %c10 = arith.constant 10 : index
    %69 = memref.load %arg0[%c10] : memref<16xf32, #tpu.memory_space<smem>>
    %70 = vector.broadcast %69 : f32 to vector<56x128xf32>
    %71 = arith.mulf %70, %35 : vector<56x128xf32>
    %72 = arith.addf %68, %71 : vector<56x128xf32>
    %c55_i32 = arith.constant 55 : i32
    %73 = tpu.dynamic_rotate %72 by %c55_i32 dim 0 : vector<56x128xf32>, i32 -> vector<56x128xf32>
    %74 = arith.addf %61, %73 : vector<56x128xf32>
    %75 = math.tanh %74 : vector<56x128xf32>
    %cst_14 = arith.constant 0.000000e+00 : f32
    %76 = vector.broadcast %cst_14 : f32 to vector<56x128xf32>
    %77 = arith.select %26, %75, %76 : vector<56x128xi1>, vector<56x128xf32>
    %78 = vector.broadcast %3 : f32 to vector<56x128xf32>
    %79 = arith.mulf %78, %77 : vector<56x128xf32>
    %80 = vector.broadcast %4 : f32 to vector<56x128xf32>
    %81 = arith.addf %79, %80 : vector<56x128xf32>
    %82 = math.tanh %81 : vector<56x128xf32>
    %83 = vector.extract_strided_slice %82 {offsets = [0, 0], sizes = [53, 93], strides = [1, 1]} : vector<56x128xf32> to vector<53x93xf32>
    %c0_15 = arith.constant 0 : index
    %c0_16 = arith.constant 0 : index
    %84 = vector.load %arg2[%c0_15, %c0_16] : memref<53x93xf32, #tpu.memory_space<vmem>>, vector<53x93xf32>
    tpu.vector_store %arg2[%c0_15, %c0_16], %83 {strides = array<i32>} : memref<53x93xf32, #tpu.memory_space<vmem>>, vector<53x93xf32>,
    return
  }
}

</mosaic_0001>

<llo_original>
// kernel: model_tanh.1
$region0: #{model_tanh.1}
  #allocation0 [shape = 'u32[]', space=smem, size = 0x4, offset = 0x4, fixed_abs, tag = 'smem constant byte address 0x4 - core index']
  #allocation1 [shape = 'u32[72,128]{1,0:T(1,128)}', space=vmem, size = 0x9000, scoped, tag = 'internal scratch']
  #allocation2 [shape = 'f32[56,128]{1,0:T(8,128)}', space=vmem, size = 0x7000, scoped, tag = 'scratch operand']
  %s0 = inlined_call_operand.vmem [shape: f32[16], index: 0, kind: input, shape index: {}]
  %s1 = inlined_call_operand.vmem [shape: f32[49,89], index: 1, kind: input, shape index: {}]
  %s2 = inlined_call_operand.vmem [shape: f32[53,93], index: 2, kind: output, shape index: {}]
  %s3 = sld [smem:[#allocation0]]
  $region22: #{model_tanh.1} parent=0
    _
  %s5 = ssub.s32 1, %s3
  %s6 = scalar_select 0, %s5, %s3
  $region1: #{model_tanh.1} parent=0
    #allocation3 [shape = 'u8[512]{0}', space=smem, size = 0x200, scoped, tag = 'input window, operand 0, single buffered']
    #allocation4 [shape = 's32[1]{0}', space=sflag, size = 0x4, scoped, tag = 'scoped memory for model_tanh.1']
    %7 = vsyncpa [#allocation4], 0
    // Predicated region
    $region2: #{model_tanh.1} parent=1 // pred_check
      _
    $region3: #{model_tanh.1} parent=1 // pred_check_branch
      %9 = sbr.rel (0) target = $region5
    $region4: #{model_tanh.1} parent=1 // pred_region
      %11 = vsyncadd [#allocation4], 0
      %s13 = sshll.u32 %s0, 4
      %s14 = int_to_ptr.vmem [resolvable:$true] %s13
      %16 = dma.vmem_to_smem %s14, 16, [#allocation3], [#allocation4]
    $region5: #{model_tanh.1} parent=1 // pred_fallthru
      _
    // Predicated region
    $region6: #{model_tanh.1} parent=1 // pred_check
      _
    $region7: #{model_tanh.1} parent=1 // pred_check_branch
      %18 = sbr.rel (0) target = $region9
    $region8: #{model_tanh.1} parent=1 // pred_region
      _
    $region9: #{model_tanh.1} parent=1 // pred_fallthru
      _
    // Predicated region
    $region10: #{model_tanh.1} parent=1 // pred_check
      _
    $region11: #{model_tanh.1} parent=1 // pred_check_branch
      %20 = sbr.rel (0) target = $region13
    $region12: #{model_tanh.1} parent=1 // pred_region
      %22 = dma.done [#allocation4], 16
    $region13: #{model_tanh.1} parent=1 // pred_fallthru
      _
    %23 = sfence
    %s24 = sld [smem:[#allocation3]]
    %s25 = sld [smem:[#allocation3 + $0x1]]
    %s26 = sld [smem:[#allocation3 + $0xb]]
    %s27 = sld [smem:[#allocation3 + $0xc]]
    %s28 = sld [smem:[#allocation3 + $0xd]]
    %29 = vst [vmem:[#allocation2 + $0x31] sm:$0x7f] 0.0
    %vm30 = vcmask 1048264
    %31 = vst.msk [vmem:[#allocation2] sm:$0xff] %vm30, 0.0
    %32 = vst.msk [vmem:[#allocation2 + $0x8] sm:$0xff] %vm30, 0.0
    %33 = vst.msk [vmem:[#allocation2 + $0x10] sm:$0xff] %vm30, 0.0
    %34 = vst.msk [vmem:[#allocation2 + $0x18] sm:$0xff] %vm30, 0.0
    %35 = vst.msk [vmem:[#allocation2 + $0x20] sm:$0xff] %vm30, 0.0
    %36 = vst.msk [vmem:[#allocation2 + $0x28] sm:$0xff] %vm30, 0.0
    %vm37 = vcmask 1041096
    %38 = vst.msk [vmem:[#allocation2 + $0x30] sm:$0x1] %vm37, 0.0
    %v39 = vld [vmem:[%s1] sm:$0xff]
    %v40 = vld [vmem:[%s1 + $0x8] sm:$0xff]
    %v41 = vld [vmem:[%s1 + $0x10] sm:$0xff]
    %v42 = vld [vmem:[%s1 + $0x18] sm:$0xff]
    %v43 = vld [vmem:[%s1 + $0x20] sm:$0xff]
    %v44 = vld [vmem:[%s1 + $0x28] sm:$0xff]
    %v45 = vld [vmem:[%s1 + $0x30] sm:$0x1]
    %vm46 = vcmask 728064
    %47 = vst.msk [vmem:[#allocation2] sm:$0xff] %vm46, %v39
    %48 = vst.msk [vmem:[#allocation2 + $0x8] sm:$0xff] %vm46, %v40
    %49 = vst.msk [vmem:[#allocation2 + $0x10] sm:$0xff] %vm46, %v41
    %50 = vst.msk [vmem:[#allocation2 + $0x18] sm:$0xff] %vm46, %v42
    %51 = vst.msk [vmem:[#allocation2 + $0x20] sm:$0xff] %vm46, %v43
    %52 = vst.msk [vmem:[#allocation2 + $0x28] sm:$0xff] %vm46, %v44
    %vm53 = vcmask 720896
    %54 = vst.msk [vmem:[#allocation2 + $0x30] sm:$0x1] %vm53, %v45
    %v55 = vld [vmem:[#allocation2] sm:$0xff]
    %v56 = vld [vmem:[#allocation2 + $0x8] sm:$0xff]
    %v57 = vld [vmem:[#allocation2 + $0x10] sm:$0xff]
    %v58 = vld [vmem:[#allocation2 + $0x18] sm:$0xff]
    %v59 = vld [vmem:[#allocation2 + $0x20] sm:$0xff]
    %v60 = vld [vmem:[#allocation2 + $0x28] sm:$0xff]
    %v61 = vld [vmem:[#allocation2 + $0x30] sm:$0xff]
    %v62 = vrot.slane %v55, 6
    %v63 = vrot.slane %v56, 6
    %v64 = vrot.slane %v57, 6
    %v65 = vrot.slane %v58, 6
    %v66 = vrot.slane %v59, 6
    %v67 = vrot.slane %v60, 6
    %v68 = vrot.slane %v61, 6
    %v69 = vlaneseq
    %v70 = vshrl.u32 %v69, 7
    %vm71 = vcmp.lt.s32.totalorder %v70, 2
    %v72 = vsel %vm71, %v67, %v68
    %v73 = vsel %vm71, %v66, %v67
    %v74 = vsel %vm71, %v65, %v66
    %v75 = vsel %vm71, %v64, %v65
    %v76 = vsel %vm71, %v63, %v64
    %v77 = vsel %vm71, %v62, %v63
    %v78 = vsel %vm71, %v68, %v62
    %79 = vrot.lane.b32.xlu0 %v78, 2
    %v80 = vpop.permute.xlu0 %79
    %81 = vrot.lane.b32.xlu0 %v77, 2
    %v82 = vpop.permute.xlu0 %81
    %83 = vrot.lane.b32.xlu0 %v76, 2
    %v84 = vpop.permute.xlu0 %83
    %85 = vrot.lane.b32.xlu0 %v75, 2
    %v86 = vpop.permute.xlu0 %85
    %87 = vrot.lane.b32.xlu0 %v74, 2
    %v88 = vpop.permute.xlu0 %87
    %89 = vrot.lane.b32.xlu0 %v73, 2
    %v90 = vpop.permute.xlu0 %89
    %91 = vrot.lane.b32.xlu0 %v72, 2
    %v92 = vpop.permute.xlu0 %91
    %v93 = vadd.s32 %v70, 8
    %v94 = vadd.s32 %v70, 16
    %v95 = vadd.s32 %v70, 24
    %v96 = vadd.s32 %v70, 32
    %v97 = vadd.s32 %v70, 40
    %v98 = vadd.s32 %v70, 48
    %v99 = vlaneseq
    %v100 = vand.u32 %v99, 127
    %vm101 = vcmp.ge.s32.totalorder %v70, 1
    %vm102 = vcmp.ge.s32.totalorder %v93, 1
    %vm103 = vcmp.ge.s32.totalorder %v94, 1
    %vm104 = vcmp.ge.s32.totalorder %v95, 1
    %vm105 = vcmp.ge.s32.totalorder %v96, 1
    %vm106 = vcmp.ge.s32.totalorder %v97, 1
    %vm107 = vcmp.ge.s32.totalorder %v98, 1
    %vm108 = vcmp.le.s32.totalorder %v70, 51
    %vm109 = vcmp.le.s32.totalorder %v93, 51
    %vm110 = vcmp.le.s32.totalorder %v94, 51
    %vm111 = vcmp.le.s32.totalorder %v95, 51
    %vm112 = vcmp.le.s32.totalorder %v96, 51
    %vm113 = vcmp.le.s32.totalorder %v97, 51
    %vm114 = vcmp.le.s32.totalorder %v98, 51
    %vm115 = vmand %vm101, %vm108
    %vm116 = vmand %vm102, %vm109
    %vm117 = vmand %vm103, %vm110
    %vm118 = vmand %vm104, %vm111
    %vm119 = vmand %vm105, %vm112
    %vm120 = vmand %vm106, %vm113
    %vm121 = vmand %vm107, %vm114
    %vm122 = vcmp.ge.s32.totalorder %v100, 1
    %vm123 = vmand %vm115, %vm122
    %vm124 = vmand %vm116, %vm122
    %vm125 = vmand %vm117, %vm122
    %vm126 = vmand %vm118, %vm122
    %vm127 = vmand %vm119, %vm122
    %vm128 = vmand %vm120, %vm122
    %vm129 = vmand %vm121, %vm122
    %vm130 = vcmp.le.s32.totalorder %v100, 91
    %vm131 = vmand %vm123, %vm130
    %vm132 = vmand %vm124, %vm130
    %vm133 = vmand %vm125, %vm130
    %vm134 = vmand %vm126, %vm130
    %vm135 = vmand %vm127, %vm130
    %vm136 = vmand %vm128, %vm130
    %vm137 = vmand %vm129, %vm130
    %v138 = vstv %s24
    %v139 = vmul.f32 %v138, %v80
    %v140 = vmul.f32 %v138, %v82
    %v141 = vmul.f32 %v138, %v84
    %v142 = vmul.f32 %v138, %v86
    %v143 = vmul.f32 %v138, %v88
    %v144 = vmul.f32 %v138, %v90
    %v145 = vmul.f32 %v138, %v92
    %v146 = vstv %s25
    %v147 = vadd.f32 %v139, %v146
    %v148 = vadd.f32 %v140, %v146
    %v149 = vadd.f32 %v141, %v146
    %v150 = vadd.f32 %v142, %v146
    %v151 = vadd.f32 %v143, %v146
    %v152 = vadd.f32 %v144, %v146
    %v153 = vadd.f32 %v145, %v146
    %v154 = vtanh.pop %v147
    %v155 = vtanh.pop %v148
    %v156 = vtanh.pop %v149
    %v157 = vtanh.pop %v150
    %v158 = vtanh.pop %v151
    %v159 = vtanh.pop %v152
    %v160 = vtanh.pop %v153
    %v161 = vsel %vm131, %v154, 0.0
    %v162 = vsel %vm132, %v155, 0.0
    %v163 = vsel %vm133, %v156, 0.0
    %v164 = vsel %vm134, %v157, 0.0
    %v165 = vsel %vm135, %v158, 0.0
    %v166 = vsel %vm136, %v159, 0.0
    %v167 = vsel %vm137, %v160, 0.0
    %168 = vrot.lane.b32.xlu0 %v161, 1
    %v169 = vpop.permute.xlu0 %168
    %170 = vrot.lane.b32.xlu0 %v162, 1
    %v171 = vpop.permute.xlu0 %170
    %172 = vrot.lane.b32.xlu0 %v163, 1
    %v173 = vpop.permute.xlu0 %172
    %174 = vrot.lane.b32.xlu0 %v164, 1
    %v175 = vpop.permute.xlu0 %174
    %176 = vrot.lane.b32.xlu0 %v165, 1
    %v177 = vpop.permute.xlu0 %176
    %178 = vrot.lane.b32.xlu0 %v166, 1
    %v179 = vpop.permute.xlu0 %178
    %180 = vrot.lane.b32.xlu0 %v167, 1
    %v181 = vpop.permute.xlu0 %180
    %182 = vrot.lane.b32.xlu0 %v161, 127
    %v183 = vpop.permute.xlu0 %182
    %184 = vrot.lane.b32.xlu0 %v162, 127
    %v185 = vpop.permute.xlu0 %184
    %186 = vrot.lane.b32.xlu0 %v163, 127
    %v187 = vpop.permute.xlu0 %186
    %188 = vrot.lane.b32.xlu0 %v164, 127
    %v189 = vpop.permute.xlu0 %188
    %190 = vrot.lane.b32.xlu0 %v165, 127
    %v191 = vpop.permute.xlu0 %190
    %192 = vrot.lane.b32.xlu0 %v166, 127
    %v193 = vpop.permute.xlu0 %192
    %194 = vrot.lane.b32.xlu0 %v167, 127
    %v195 = vpop.permute.xlu0 %194
    %s196 = sld [smem:[#allocation3 + $0x2]]
    %v197 = vstv %s196
    %v198 = vmul.f32 %v197, %v169
    %v199 = vmul.f32 %v197, %v171
    %v200 = vmul.f32 %v197, %v173
    %v201 = vmul.f32 %v197, %v175
    %v202 = vmul.f32 %v197, %v177
    %v203 = vmul.f32 %v197, %v179
    %v204 = vmul.f32 %v197, %v181
    %s205 = sld [smem:[#allocation3 + $0x3]]
    %v206 = vstv %s205
    %v207 = vmul.f32 %v206, %v161
    %v208 = vmul.f32 %v206, %v162
    %v209 = vmul.f32 %v206, %v163
    %v210 = vmul.f32 %v206, %v164
    %v211 = vmul.f32 %v206, %v165
    %v212 = vmul.f32 %v206, %v166
    %v213 = vmul.f32 %v206, %v167
    %v214 = vadd.f32 %v198, %v207
    %v215 = vadd.f32 %v199, %v208
    %v216 = vadd.f32 %v200, %v209
    %v217 = vadd.f32 %v201, %v210
    %v218 = vadd.f32 %v202, %v211
    %v219 = vadd.f32 %v203, %v212
    %v220 = vadd.f32 %v204, %v213
    %s221 = sld [smem:[#allocation3 + $0x4]]
    %v222 = vstv %s221
    %v223 = vmul.f32 %v222, %v183
    %v224 = vmul.f32 %v222, %v185
    %v225 = vmul.f32 %v222, %v187
    %v226 = vmul.f32 %v222, %v189
    %v227 = vmul.f32 %v222, %v191
    %v228 = vmul.f32 %v222, %v193
    %v229 = vmul.f32 %v222, %v195
    %v230 = vadd.f32 %v214, %v223
    %v231 = vadd.f32 %v215, %v224
    %v232 = vadd.f32 %v216, %v225
    %v233 = vadd.f32 %v217, %v226
    %v234 = vadd.f32 %v218, %v227
    %v235 = vadd.f32 %v219, %v228
    %v236 = vadd.f32 %v220, %v229
    %v237 = vrot.slane %v230, 7
    %v238 = vrot.slane %v231, 7
    %v239 = vrot.slane %v232, 7
    %v240 = vrot.slane %v233, 7
    %v241 = vrot.slane %v234, 7
    %v242 = vrot.slane %v235, 7
    %v243 = vrot.slane %v236, 7
    %vm244 = vcmp.lt.s32.totalorder %v70, 1
    %v245 = vsel %vm244, %v242, %v243
    %v246 = vsel %vm244, %v241, %v242
    %v247 = vsel %vm244, %v240, %v241
    %v248 = vsel %vm244, %v239, %v240
    %v249 = vsel %vm244, %v238, %v239
    %v250 = vsel %vm244, %v237, %v238
    %v251 = vsel %vm244, %v243, %v237
    %s252 = sld [smem:[#allocation3 + $0x5]]
    %v253 = vstv %s252
    %v254 = vmul.f32 %v253, %v169
    %v255 = vmul.f32 %v253, %v171
    %v256 = vmul.f32 %v253, %v173
    %v257 = vmul.f32 %v253, %v175
    %v258 = vmul.f32 %v253, %v177
    %v259 = vmul.f32 %v253, %v179
    %v260 = vmul.f32 %v253, %v181
    %s261 = sld [smem:[#allocation3 + $0x6]]
    %v262 = vstv %s261
    %v263 = vmul.f32 %v262, %v161
    %v264 = vmul.f32 %v262, %v162
    %v265 = vmul.f32 %v262, %v163
    %v266 = vmul.f32 %v262, %v164
    %v267 = vmul.f32 %v262, %v165
    %v268 = vmul.f32 %v262, %v166
    %v269 = vmul.f32 %v262, %v167
    %v270 = vadd.f32 %v254, %v263
    %v271 = vadd.f32 %v255, %v264
    %v272 = vadd.f32 %v256, %v265
    %v273 = vadd.f32 %v257, %v266
    %v274 = vadd.f32 %v258, %v267
    %v275 = vadd.f32 %v259, %v268
    %v276 = vadd.f32 %v260, %v269
    %s277 = sld [smem:[#allocation3 + $0x7]]
    %v278 = vstv %s277
    %v279 = vmul.f32 %v278, %v183
    %v280 = vmul.f32 %v278, %v185
    %v281 = vmul.f32 %v278, %v187
    %v282 = vmul.f32 %v278, %v189
    %v283 = vmul.f32 %v278, %v191
    %v284 = vmul.f32 %v278, %v193
    %v285 = vmul.f32 %v278, %v195
    %v286 = vadd.f32 %v270, %v279
    %v287 = vadd.f32 %v271, %v280
    %v288 = vadd.f32 %v272, %v281
    %v289 = vadd.f32 %v273, %v282
    %v290 = vadd.f32 %v274, %v283
    %v291 = vadd.f32 %v275, %v284
    %v292 = vadd.f32 %v276, %v285
    %v293 = vstv %s26
    %v294 = vadd.f32 %v286, %v293
    %v295 = vadd.f32 %v287, %v293
    %v296 = vadd.f32 %v288, %v293
    %v297 = vadd.f32 %v289, %v293
    %v298 = vadd.f32 %v290, %v293
    %v299 = vadd.f32 %v291, %v293
    %v300 = vadd.f32 %v292, %v293
    %v301 = vadd.f32 %v251, %v294
    %v302 = vadd.f32 %v250, %v295
    %v303 = vadd.f32 %v249, %v296
    %v304 = vadd.f32 %v248, %v297
    %v305 = vadd.f32 %v247, %v298
    %v306 = vadd.f32 %v246, %v299
    %v307 = vadd.f32 %v245, %v300
    %s308 = sld [smem:[#allocation3 + $0x8]]
    %v309 = vstv %s308
    %v310 = vmul.f32 %v309, %v169
    %v311 = vmul.f32 %v309, %v171
    %v312 = vmul.f32 %v309, %v173
    %v313 = vmul.f32 %v309, %v175
    %v314 = vmul.f32 %v309, %v177
    %v315 = vmul.f32 %v309, %v179
    %v316 = vmul.f32 %v309, %v181
    %s317 = sld [smem:[#allocation3 + $0x9]]
    %v318 = vstv %s317
    %v319 = vmul.f32 %v318, %v161
    %v320 = vmul.f32 %v318, %v162
    %v321 = vmul.f32 %v318, %v163
    %v322 = vmul.f32 %v318, %v164
    %v323 = vmul.f32 %v318, %v165
    %v324 = vmul.f32 %v318, %v166
    %v325 = vmul.f32 %v318, %v167
    %v326 = vadd.f32 %v310, %v319
    %v327 = vadd.f32 %v311, %v320
    %v328 = vadd.f32 %v312, %v321
    %v329 = vadd.f32 %v313, %v322
    %v330 = vadd.f32 %v314, %v323
    %v331 = vadd.f32 %v315, %v324
    %v332 = vadd.f32 %v316, %v325
    %s333 = sld [smem:[#allocation3 + $0xa]]
    %v334 = vstv %s333
    %v335 = vmul.f32 %v334, %v183
    %v336 = vmul.f32 %v334, %v185
    %v337 = vmul.f32 %v334, %v187
    %v338 = vmul.f32 %v334, %v189
    %v339 = vmul.f32 %v334, %v191
    %v340 = vmul.f32 %v334, %v193
    %v341 = vmul.f32 %v334, %v195
    %v342 = vadd.f32 %v326, %v335
    %v343 = vadd.f32 %v327, %v336
    %v344 = vadd.f32 %v328, %v337
    %v345 = vadd.f32 %v329, %v338
    %v346 = vadd.f32 %v330, %v339
    %v347 = vadd.f32 %v331, %v340
    %v348 = vadd.f32 %v332, %v341
    %v349 = vrot.slane %v342, 1
    %v350 = vrot.slane %v343, 1
    %v351 = vrot.slane %v344, 1
    %v352 = vrot.slane %v345, 1
    %v353 = vrot.slane %v346, 1
    %v354 = vrot.slane %v347, 1
    %v355 = vrot.slane %v348, 1
    %vm356 = vcmp.lt.s32.totalorder %v70, 7
    %v357 = vsel %vm356, %v354, %v355
    %v358 = vsel %vm356, %v353, %v354
    %v359 = vsel %vm356, %v352, %v353
    %v360 = vsel %vm356, %v351, %v352
    %v361 = vsel %vm356, %v350, %v351
    %v362 = vsel %vm356, %v349, %v350
    %v363 = vsel %vm356, %v355, %v349
    %v364 = vadd.f32 %v301, %v362
    %v365 = vadd.f32 %v302, %v361
    %v366 = vadd.f32 %v303, %v360
    %v367 = vadd.f32 %v304, %v359
    %v368 = vadd.f32 %v305, %v358
    %v369 = vadd.f32 %v306, %v357
    %v370 = vadd.f32 %v307, %v363
    %v371 = vtanh.pop %v364
    %v372 = vtanh.pop %v365
    %v373 = vtanh.pop %v366
    %v374 = vtanh.pop %v367
    %v375 = vtanh.pop %v368
    %v376 = vtanh.pop %v369
    %v377 = vtanh.pop %v370
    %v378 = vsel %vm131, %v371, 0.0
    %v379 = vsel %vm132, %v372, 0.0
    %v380 = vsel %vm133, %v373, 0.0
    %v381 = vsel %vm134, %v374, 0.0
    %v382 = vsel %vm135, %v375, 0.0
    %v383 = vsel %vm136, %v376, 0.0
    %v384 = vsel %vm137, %v377, 0.0
    %v385 = vstv %s27
    %v386 = vmul.f32 %v385, %v378
    %v387 = vmul.f32 %v385, %v379
    %v388 = vmul.f32 %v385, %v380
    %v389 = vmul.f32 %v385, %v381
    %v390 = vmul.f32 %v385, %v382
    %v391 = vmul.f32 %v385, %v383
    %v392 = vmul.f32 %v385, %v384
    %v393 = vstv %s28
    %v394 = vadd.f32 %v386, %v393
    %v395 = vadd.f32 %v387, %v393
    %v396 = vadd.f32 %v388, %v393
    %v397 = vadd.f32 %v389, %v393
    %v398 = vadd.f32 %v390, %v393
    %v399 = vadd.f32 %v391, %v393
    %v400 = vadd.f32 %v392, %v393
    %v401 = vtanh.pop %v394
    %v402 = vtanh.pop %v395
    %v403 = vtanh.pop %v396
    %v404 = vtanh.pop %v397
    %v405 = vtanh.pop %v398
    %v406 = vtanh.pop %v399
    %v407 = vtanh.pop %v400
    %vm408 = vcmask 760832
    %409 = vst.msk [vmem:[%s2] sm:$0xff] %vm408, %v401
    %410 = vst.msk [vmem:[%s2 + $0x8] sm:$0xff] %vm408, %v402
    %411 = vst.msk [vmem:[%s2 + $0x10] sm:$0xff] %vm408, %v403
    %412 = vst.msk [vmem:[%s2 + $0x18] sm:$0xff] %vm408, %v404
    %413 = vst.msk [vmem:[%s2 + $0x20] sm:$0xff] %vm408, %v405
    %414 = vst.msk [vmem:[%s2 + $0x28] sm:$0xff] %vm408, %v406
    %vm415 = vcmask 757760
    %416 = vst.msk [vmem:[%s2 + $0x30] sm:$0x1f] %vm415, %v407
    // Predicated region
    $region14: #{model_tanh.1} parent=1 // pred_check
      _
    $region15: #{model_tanh.1} parent=1 // pred_check_branch
      %418 = sbr.rel (0) target = $region17
    $region16: #{model_tanh.1} parent=1 // pred_region
      _
    $region17: #{model_tanh.1} parent=1 // pred_fallthru
      _
    // Predicated region
    $region18: #{model_tanh.1} parent=1 // pred_check
      _
    $region19: #{model_tanh.1} parent=1 // pred_check_branch
      %420 = sbr.rel (0) target = $region21
    $region20: #{model_tanh.1} parent=1 // pred_region
      _
    $region21: #{model_tanh.1} parent=1 // pred_fallthru
      _
    %421 = vsyncpa [#allocation4], 1

</llo_original>
